<compile_context>
chip_gen: v7x
topology: tpu7x:2x2x1
jax: 0.10.0
libtpu: 0.0.40
codegen_flags: <defaults>
</compile_context>

<pallas_src>
import functools

import jax
import jax.numpy as jnp
from jax.experimental import pallas as pl
from jax.experimental.pallas import tpu as pltpu

LANE = 128             # lane width; hidden feature dims padded to this
_W1_OFF = 0            # rows [0,   128) : W1 (padded [in_dim -> 128, fc1 -> 128])
_W2_OFF = 128          # rows [128, 256) : W2 (padded [fc1 -> 128, fc2 -> 128])
_W3_OFF = 256          # rows [256, 384) : W3 (padded [fc2 -> 128, n_actions -> 128])
_B1_OFF = 384          # 8-row-aligned bias rows
_B2_OFF = 392
_B3_OFF = 400
_SLAB_ROWS = 408       # 3*128 + 3*8


def qnetwork_kernel(x_ref, p_ref, out_ref):
    in_dim = x_ref.shape[1]        # static (4)
    n_actions = out_ref.shape[1]   # static (e.g. 2)

    # Static views of the resident parameter slab.
    w1 = p_ref[_W1_OFF:_W1_OFF + in_dim, :]   # (in_dim, 128)
    w2 = p_ref[_W2_OFF:_W2_OFF + LANE, :]     # (128, 128)
    w3 = p_ref[_W3_OFF:_W3_OFF + LANE, :]     # (128, 128)
    b1 = p_ref[_B1_OFF:_B1_OFF + 1, :]
    b2 = p_ref[_B2_OFF:_B2_OFF + 1, :]
    b3 = p_ref[_B3_OFF:_B3_OFF + 1, :]

    # fc1 + relu: (tb, in_dim) @ (in_dim, 128). Padded weight/bias columns are
    # zero, so padded hidden lanes stay exactly 0 through the ReLUs.
    h1 = jnp.dot(x_ref[...], w1, preferred_element_type=jnp.float32)
    h1 = jnp.maximum(h1 + b1, 0.0)
    # fc2 + relu
    h2 = jnp.dot(h1, w2, preferred_element_type=jnp.float32)
    h2 = jnp.maximum(h2 + b2, 0.0)
    # fc3 (no activation); keep only the real action lanes for the store.
    out = jnp.dot(h2, w3, preferred_element_type=jnp.float32) + b3
    out_ref[...] = out[:, :n_actions].astype(out_ref.dtype)


def pack_params(w1, b1, w2, b2, w3, b3):
    """Pack all params into one zero-padded [408, 128] f32 slab (single DMA)."""
    in_dim, fc1 = w1.shape
    fc2 = w2.shape[1]
    n_actions = w3.shape[1]
    assert max(in_dim, fc1, fc2, n_actions) <= LANE, "feature dims must be <= 128"

    slab = jnp.zeros((_SLAB_ROWS, LANE), jnp.float32)
    slab = slab.at[_W1_OFF:_W1_OFF + in_dim, :fc1].set(w1.astype(jnp.float32))
    slab = slab.at[_W2_OFF:_W2_OFF + fc1, :fc2].set(w2.astype(jnp.float32))
    slab = slab.at[_W3_OFF:_W3_OFF + fc2, :n_actions].set(w3.astype(jnp.float32))
    slab = slab.at[_B1_OFF, :fc1].set(b1.reshape(-1).astype(jnp.float32))
    slab = slab.at[_B2_OFF, :fc2].set(b2.reshape(-1).astype(jnp.float32))
    slab = slab.at[_B3_OFF, :n_actions].set(b3.reshape(-1).astype(jnp.float32))
    return slab


def _choose_tile(B, max_tile=2048):
    """Pick a batch tile: ~2 grid steps for moderate B (v7x megacore split),
    one tiny tile for very small B, capped per-tile size for huge B."""
    if B <= 8:
        return 8
    half = (B + 1) // 2
    tb = ((half + 7) // 8) * 8
    return min(tb, max_tile)


@functools.partial(jax.jit, static_argnames=("n_actions",))
def qnetwork_forward(state, param_slab, n_actions):
    """state: [B, 4] float. Returns Q-values: [B, n_actions] f32.

    Note: tile size is derived from B at trace time, so distinct batch sizes
    recompile (latency concern only, not correctness).
    """
    B, in_dim = state.shape
    tb = _choose_tile(B)
    b_pad = ((B + tb - 1) // tb) * tb

    x = state.astype(jnp.float32)
    if b_pad != B:
        x = jnp.pad(x, ((0, b_pad - B), (0, 0)))   # pad batch rows only

    out = pl.pallas_call(
        qnetwork_kernel,
        out_shape=jax.ShapeDtypeStruct((b_pad, n_actions), jnp.float32),
        grid_spec=pltpu.PrefetchScalarGridSpec(
            num_scalar_prefetch=0,
            grid=(b_pad // tb,),
            in_specs=[
                pl.BlockSpec((tb, in_dim), lambda i: (i, 0)),          # state tile
                pl.BlockSpec((_SLAB_ROWS, LANE), lambda i: (0, 0)),    # params: resident
            ],
            out_specs=pl.BlockSpec((tb, n_actions), lambda i: (i, 0)),
        ),
        compiler_params=pltpu.CompilerParams(
            dimension_semantics=("parallel",)),   # megacore batch split on v7x
    )(x, param_slab)

    if b_pad != B:
        out = out[:B]
    return out


def init_params(key, in_dim, fc1, fc2, n_actions):
    """Mirror torch.nn.Linear default init: uniform(+-1/sqrt(fan_in)) for W and b."""
    ks = jax.random.split(key, 6)

    def linear(kw, kb, fan_in, fan_out):
        bound = 1.0 / jnp.sqrt(jnp.float32(fan_in))
        w = jax.random.uniform(kw, (fan_in, fan_out), jnp.float32, -bound, bound)
        b = jax.random.uniform(kb, (fan_out,), jnp.float32, -bound, bound)
        return w, b

    w1, b1 = linear(ks[0], ks[1], in_dim, fc1)
    w2, b2 = linear(ks[2], ks[3], fc1, fc2)
    w3, b3 = linear(ks[4], ks[5], fc2, n_actions)
    return w1, b1, w2, b2, w3, b3


def _jax_reference(state, w1, b1, w2, b2, w3, b3):
    h = jnp.maximum(state @ w1 + b1, 0.0)
    h = jnp.maximum(h @ w2 + b2, 0.0)
    return h @ w3 + b3


if __name__ == "__main__":
    # TODO(synk): optimizer (Adam), MSELoss and device placement from the torch
    # module are training-time machinery, not part of forward(); not implemented.
    key = jax.random.PRNGKey(0)
    k_state, k_params, k_small = jax.random.split(key, 3)

    IN_DIM, FC1, FC2, N_ACTIONS = 4, 32, 32, 2
    params = init_params(k_params, IN_DIM, FC1, FC2, N_ACTIONS)
    slab = pack_params(*params)

    # Replay-sized batch: exercises the 2-step parallel grid + resident params.
    B = 512
    state = jax.random.normal(k_state, (B, IN_DIM), jnp.float32)
    q = qnetwork_forward(state, slab, n_actions=N_ACTIONS)
    q = jax.block_until_ready(q)
    ref = _jax_reference(state, *params)
    assert q.shape == (B, N_ACTIONS)
    assert jnp.allclose(q, ref, atol=1e-4), "mismatch vs JAX reference (B=512)"

    # Small / ragged batch path (single padded 8-row tile).
    Bs = 7
    state_s = jax.random.normal(k_small, (Bs, IN_DIM), jnp.float32)
    q_s = jax.block_until_ready(qnetwork_forward(state_s, slab, n_actions=N_ACTIONS))
    ref_s = _jax_reference(state_s, *params)
    assert q_s.shape == (Bs, N_ACTIONS)
    assert jnp.allclose(q_s, ref_s, atol=1e-4), "mismatch vs JAX reference (B=7)"

    print("KERNEL_OK")
</pallas_src>

<mosaic_0001>
module attributes {stable_mosaic.version = 11 : i64} {
  func.func @qnetwork_kernel(%arg0: i32, %arg1: memref<256x4xf32, #tpu.memory_space<vmem>>, %arg2: memref<408x128xf32, #tpu.memory_space<vmem>>, %arg3: memref<256x2xf32, #tpu.memory_space<vmem>>) attributes {dimension_semantics = [#tpu.dimension_semantics<parallel>], iteration_bounds = array<i64: 2>, scalar_prefetch = 0 : i64, scratch_operands = 0 : i64, tpu.core_type = #tpu.core_type<tc>, window_params = [{transform_indices = @transform_0, window_bounds = array<i64: 256, 4>}, {pipeline_mode = #tpu.pipeline_mode<synchronous>, transform_indices = @transform_1, window_bounds = array<i64: 408, 128>}, {transform_indices = @transform_2, window_bounds = array<i64: 256, 2>}]} {
    %c0 = arith.constant 0 : index
    %c0_0 = arith.constant 0 : index
    %0 = vector.load %arg2[%c0, %c0_0] : memref<408x128xf32, #tpu.memory_space<vmem>>, vector<4x128xf32>
    %c128 = arith.constant 128 : index
    %c0_1 = arith.constant 0 : index
    %1 = vector.load %arg2[%c128, %c0_1] : memref<408x128xf32, #tpu.memory_space<vmem>>, vector<128x128xf32>
    %c256 = arith.constant 256 : index
    %c0_2 = arith.constant 0 : index
    %2 = vector.load %arg2[%c256, %c0_2] : memref<408x128xf32, #tpu.memory_space<vmem>>, vector<128x128xf32>
    %c384 = arith.constant 384 : index
    %c0_3 = arith.constant 0 : index
    %3 = vector.load %arg2[%c384, %c0_3] : memref<408x128xf32, #tpu.memory_space<vmem>>, vector<1x128xf32>
    %c392 = arith.constant 392 : index
    %c0_4 = arith.constant 0 : index
    %4 = vector.load %arg2[%c392, %c0_4] : memref<408x128xf32, #tpu.memory_space<vmem>>, vector<1x128xf32>
    %c400 = arith.constant 400 : index
    %c0_5 = arith.constant 0 : index
    %5 = vector.load %arg2[%c400, %c0_5] : memref<408x128xf32, #tpu.memory_space<vmem>>, vector<1x128xf32>
    %c0_6 = arith.constant 0 : index
    %c0_7 = arith.constant 0 : index
    %6 = vector.load %arg1[%c0_6, %c0_7] : memref<256x4xf32, #tpu.memory_space<vmem>>, vector<256x4xf32>
    %cst = arith.constant dense<0.000000e+00> : vector<256x128xf32>
    %7 = tpu.matmul %6, %0, %cst {dimension_numbers = #tpu.dot_dimension_numbers<[1], [0], [0], [1], [0, 0, 1, 1], [], []>} : vector<256x4xf32>, vector<4x128xf32>, vector<256x128xf32> -> vector<256x128xf32>
    %8 = vector.broadcast %3 : vector<1x128xf32> to vector<256x128xf32>
    %9 = arith.addf %7, %8 : vector<256x128xf32>
    %cst_8 = arith.constant 0.000000e+00 : f32
    %10 = vector.broadcast %cst_8 : f32 to vector<256x128xf32>
    %11 = arith.maximumf %9, %10 : vector<256x128xf32>
    %cst_9 = arith.constant dense<0.000000e+00> : vector<256x128xf32>
    %12 = tpu.matmul %11, %1, %cst_9 {dimension_numbers = #tpu.dot_dimension_numbers<[1], [0], [0], [1], [0, 0, 1, 1], [], []>} : vector<256x128xf32>, vector<128x128xf32>, vector<256x128xf32> -> vector<256x128xf32>
    %13 = vector.broadcast %4 : vector<1x128xf32> to vector<256x128xf32>
    %14 = arith.addf %12, %13 : vector<256x128xf32>
    %cst_10 = arith.constant 0.000000e+00 : f32
    %15 = vector.broadcast %cst_10 : f32 to vector<256x128xf32>
    %16 = arith.maximumf %14, %15 : vector<256x128xf32>
    %cst_11 = arith.constant dense<0.000000e+00> : vector<256x128xf32>
    %17 = tpu.matmul %16, %2, %cst_11 {dimension_numbers = #tpu.dot_dimension_numbers<[1], [0], [0], [1], [0, 0, 1, 1], [], []>} : vector<256x128xf32>, vector<128x128xf32>, vector<256x128xf32> -> vector<256x128xf32>
    %18 = vector.broadcast %5 : vector<1x128xf32> to vector<256x128xf32>
    %19 = arith.addf %17, %18 : vector<256x128xf32>
    %20 = vector.extract_strided_slice %19 {offsets = [0, 0], sizes = [256, 2], strides = [1, 1]} : vector<256x128xf32> to vector<256x2xf32>
    %c0_12 = arith.constant 0 : index
    %c0_13 = arith.constant 0 : index
    %21 = vector.load %arg3[%c0_12, %c0_13] : memref<256x2xf32, #tpu.memory_space<vmem>>, vector<256x2xf32>
    tpu.vector_store %arg3[%c0_12, %c0_13], %20 {strides = array<i32>} : memref<256x2xf32, #tpu.memory_space<vmem>>, vector<256x2xf32>,
    return
  }
  func.func @transform_0(%arg0: i32) -> (i32, i32) {
    %c0_i32 = arith.constant 0 : i32
    %c0_i32_0 = arith.constant 0 : i32
    return %arg0, %c0_i32 : i32, i32
  }
  func.func @transform_1(%arg0: i32) -> (i32, i32) {
    %c0_i32 = arith.constant 0 : i32
    %c0_i32_0 = arith.constant 0 : i32
    %c0_i32_1 = arith.constant 0 : i32
    return %c0_i32, %c0_i32_0 : i32, i32
  }
  func.func @transform_2(%arg0: i32) -> (i32, i32) {
    %c0_i32 = arith.constant 0 : i32
    %c0_i32_0 = arith.constant 0 : i32
    return %arg0, %c0_i32 : i32, i32
  }
}

</mosaic_0001>

<llo_original>
// kernel: qnetwork_forward.1
$region0: #{qnetwork_forward.1}
  #allocation0 [shape = 'u32[]', space=smem, size = 0x4, offset = 0x4, fixed_abs, tag = 'smem constant byte address 0x4 - core index']
  #allocation1 [shape = 'u32[144,128]{1,0:T(1,128)}', space=vmem, size = 0x12000, scoped, tag = 'internal scratch']
  %s0 = inlined_call_operand.vmem [shape: f32[512,4], index: 0, kind: input, shape index: {}]
  %s1 = inlined_call_operand.vmem [shape: f32[408,128], index: 1, kind: input, shape index: {}]
  %s2 = inlined_call_operand.vmem [shape: f32[512,2], index: 2, kind: output, shape index: {}]
  %s3 = sld [smem:[#allocation0]]
  $region41: #{qnetwork_forward.1} parent=0
    _
  %s5 = ssub.s32 1, %s3
  %s6 = scalar_select 0, %s5, %s3
  loop: start=0, step=1, limit=4
  $region2: #{qnetwork_forward.1} parent=0 // loop_pre_header
    _
  $region3: #{qnetwork_forward.1} parent=0 // loop_header
    %s8 = sphi 0, %s12
    %p9 = scmp.ge.s32.totalorder %s8, 4
    %s18 = sphi 0, %s20
    %s21 = sphi 0, %s18
    %s22 = sphi 0, %s21
    %s38 = sphi 0, %s22
    %s42 = sphi 0, %s42
    %s44 = sphi 0, %s42
    %s45 = sphi 0, %s44
    %s59 = sphi 0, %s45
    %s65 = sphi 0, %s67
    %s68 = sphi 0, %s65
    %s69 = sphi 0, %s68
    %s85 = sphi 0, %s69
  $region4: #{qnetwork_forward.1} parent=0 // loop_header_branch
    %11 = sbr.rel (%p9) target = $region8
  $region5: #{qnetwork_forward.1} parent=0 // loop_body
    %s13 = ssub.s32 %s8, 1
    %s14 = ssub.s32 %s8, 2
    %s15 = sadd.s32 %s8, 1
    %s16 = ssub.s32 %s8, %s15
    %p17 = scmp.eq.s32.totalorder %s16, 0
    %s19 = sadd.s32 %s18, 1
    %s20 = scalar_select %p17, %s18, %s19
    %p23 = pneg %p17
    %p24 = scmp.eq.s32.totalorder %s8, 1
    %p25 = por %p23, %p24
    %p26 = scmp.ne.s32.totalorder %s18, %s21
    %p27 = scmp.eq.s32.totalorder %s8, 0
    %p28 = por %p26, %p27
    %p29 = scmp.ne.s32.totalorder %s18, %s21
    %p30 = scmp.eq.s32.totalorder %s13, 1
    %p31 = por %p29, %p30
    %p32 = scmp.ne.s32.totalorder %s21, %s22
    %p33 = scmp.eq.s32.totalorder %s13, 0
    %p34 = por %p32, %p33
    %p35 = scmp.ne.s32.totalorder %s21, %s22
    %p36 = scmp.eq.s32.totalorder %s14, 1
    %p37 = por %p35, %p36
    %p39 = scmp.ne.s32.totalorder %s22, %s38
    %p40 = scmp.eq.s32.totalorder %s14, 0
    %p41 = por %p39, %p40
    %s43 = sadd.s32 %s42, 1
    %p46 = scmp.eq.s32.totalorder %s8, 1
    %p47 = scmp.ne.s32.totalorder %s42, %s44
    %p48 = scmp.eq.s32.totalorder %s8, 0
    %p49 = por %p47, %p48
    %p50 = scmp.ne.s32.totalorder %s42, %s44
    %p51 = scmp.eq.s32.totalorder %s13, 1
    %p52 = por %p50, %p51
    %p53 = scmp.ne.s32.totalorder %s44, %s45
    %p54 = scmp.eq.s32.totalorder %s13, 0
    %p55 = por %p53, %p54
    %p56 = scmp.ne.s32.totalorder %s44, %s45
    %p57 = scmp.eq.s32.totalorder %s14, 1
    %p58 = por %p56, %p57
    %p60 = scmp.ne.s32.totalorder %s45, %s59
    %p61 = scmp.eq.s32.totalorder %s14, 0
    %p62 = por %p60, %p61
    %s63 = ssub.s32 %s8, %s15
    %p64 = scmp.eq.s32.totalorder %s63, 0
    %s66 = sadd.s32 %s65, 1
    %s67 = scalar_select %p64, %s65, %s66
    %p70 = pneg %p64
    %p71 = scmp.eq.s32.totalorder %s8, 1
    %p72 = por %p70, %p71
    %p73 = scmp.ne.s32.totalorder %s65, %s68
    %p74 = scmp.eq.s32.totalorder %s8, 0
    %p75 = por %p73, %p74
    %p76 = scmp.ne.s32.totalorder %s65, %s68
    %p77 = scmp.eq.s32.totalorder %s13, 1
    %p78 = por %p76, %p77
    %p79 = scmp.ne.s32.totalorder %s68, %s69
    %p80 = scmp.eq.s32.totalorder %s13, 0
    %p81 = por %p79, %p80
    %p82 = scmp.ne.s32.totalorder %s68, %s69
    %p83 = scmp.eq.s32.totalorder %s14, 1
    %p84 = por %p82, %p83
    %p86 = scmp.ne.s32.totalorder %s69, %s85
    %p87 = scmp.eq.s32.totalorder %s14, 0
    %p88 = por %p86, %p87
    %p89 = scmp.le.s32.totalorder 1, %s8
    %p90 = scmp.lt.s32.totalorder %s8, 3
    %p91 = pnand %p89, %p90
    %p92 = pneg %p91
    // Predicated region
    $region9: #{qnetwork_forward.1} parent=5 // pred_check
      _
    $region10: #{qnetwork_forward.1} parent=5 // pred_check_branch
      %94 = sbr.rel (%p91) target = $region12
    $region11: #{qnetwork_forward.1} parent=5 // pred_region
      %s95 = ssub.s32 %s8, 1
      // Predicated region
      $region13: #{qnetwork_forward.1} parent=11 // pred_check
        %p96 = pneg %p55
      $region14: #{qnetwork_forward.1} parent=11 // pred_check_branch
        %98 = sbr.rel (%p96) target = $region16
      $region15: #{qnetwork_forward.1} parent=11 // pred_region
        _
      $region16: #{qnetwork_forward.1} parent=11 // pred_fallthru
        _
    $region12: #{qnetwork_forward.1} parent=5 // pred_fallthru
      _
    %p99 = scmp.lt.s32.totalorder %s8, 2
    // Predicated region
    $region17: #{qnetwork_forward.1} parent=5 // pred_check
      %p100 = pneg %p99
    $region18: #{qnetwork_forward.1} parent=5 // pred_check_branch
      %102 = sbr.rel (%p100) target = $region20
    $region19: #{qnetwork_forward.1} parent=5 // pred_region
      // Predicated region
      $region21: #{qnetwork_forward.1} parent=19 // pred_check
        %p103 = pneg %p28
      $region22: #{qnetwork_forward.1} parent=19 // pred_check_branch
        %105 = sbr.rel (%p103) target = $region24
      $region23: #{qnetwork_forward.1} parent=19 // pred_region
        %s106 = smul.u32 32, %s8
        %p107 = scmp.lt.s32.totalorder %s106, 63
        %s108 = scalar_select %p107, %s106, 63
        %s109 = smul.addr %s108, 8
        %s110 = scalar_lea.vmem %s0, %s109
        %s111 = smul.u32 32, %s8
      $region24: #{qnetwork_forward.1} parent=19 // pred_fallthru
        _
    $region20: #{qnetwork_forward.1} parent=5 // pred_fallthru
      _
    %p112 = scmp.le.s32.totalorder 1, %s8
    %p113 = scmp.lt.s32.totalorder %s8, 3
    %p114 = pnand %p112, %p113
    %p115 = pneg %p114
    // Predicated region
    $region25: #{qnetwork_forward.1} parent=5 // pred_check
      _
    $region26: #{qnetwork_forward.1} parent=5 // pred_check_branch
      %117 = sbr.rel (%p114) target = $region28
    $region27: #{qnetwork_forward.1} parent=5 // pred_region
      %s118 = ssub.s32 %s8, 1
      %s119 = smul.u32 32, %s13
      %p120 = scmp.lt.s32.totalorder %s119, 63
      %s121 = scalar_select %p120, %s119, 63
      %s122 = smul.addr %s121, 8
      %s123 = scalar_lea.vmem %s0, %s122
      %p124 = pneg %p34
      %p125 = pneg %p31
      %p126 = pneg %p55
      %p127 = pneg %p52
      %p128 = pneg %p81
      %p129 = pneg %p78
      %s130 = smul.u32 32, %s13
      %p131 = scmp.lt.s32.totalorder %s130, 63
      %s132 = scalar_select %p131, %s130, 63
      %s133 = smul.addr %s132, 8
      %s134 = scalar_lea.vmem %s2, %s133
      %s135 = smul.u32 32, %s13
      %p136 = scmp.lt.s32.totalorder %s135, 63
      %s137 = scalar_select %p136, %s135, 63
      %s138 = smul.addr %s137, 8
      %s139 = scalar_lea.vmem %s0, %s138
      %s140 = smul.u32 32, %s13
      %s141 = smul.u32 32, %s13
      %p142 = scmp.lt.s32.totalorder %s141, 63
      %s143 = scalar_select %p142, %s141, 63
      %s144 = smul.addr %s143, 8
      %s145 = scalar_lea.vmem %s2, %s144
      %s146 = smul.u32 32, %s13
      %v147 = vld [vmem:[%s1] sm:$0xf]
      %v148 = vld [vmem:[%s1 + $0x80] sm:$0xff]
      %v149 = vld [vmem:[%s1 + $0x88] sm:$0xff]
      %v150 = vld [vmem:[%s1 + $0x90] sm:$0xff]
      %v151 = vld [vmem:[%s1 + $0x98] sm:$0xff]
      %v152 = vld [vmem:[%s1 + $0xa0] sm:$0xff]
      %v153 = vld [vmem:[%s1 + $0xa8] sm:$0xff]
      %v154 = vld [vmem:[%s1 + $0xb0] sm:$0xff]
      %v155 = vld [vmem:[%s1 + $0xb8] sm:$0xff]
      %v156 = vld [vmem:[%s1 + $0xc0] sm:$0xff]
      %v157 = vld [vmem:[%s1 + $0xc8] sm:$0xff]
      %v158 = vld [vmem:[%s1 + $0xd0] sm:$0xff]
      %v159 = vld [vmem:[%s1 + $0xd8] sm:$0xff]
      %v160 = vld [vmem:[%s1 + $0xe0] sm:$0xff]
      %v161 = vld [vmem:[%s1 + $0xe8] sm:$0xff]
      %v162 = vld [vmem:[%s1 + $0xf0] sm:$0xff]
      %v163 = vld [vmem:[%s1 + $0xf8] sm:$0xff]
      %v164 = vld [vmem:[%s1 + $0x100] sm:$0xff]
      %v165 = vld [vmem:[%s1 + $0x108] sm:$0xff]
      %v166 = vld [vmem:[%s1 + $0x110] sm:$0xff]
      %v167 = vld [vmem:[%s1 + $0x118] sm:$0xff]
      %v168 = vld [vmem:[%s1 + $0x120] sm:$0xff]
      %v169 = vld [vmem:[%s1 + $0x128] sm:$0xff]
      %v170 = vld [vmem:[%s1 + $0x130] sm:$0xff]
      %v171 = vld [vmem:[%s1 + $0x138] sm:$0xff]
      %v172 = vld [vmem:[%s1 + $0x140] sm:$0xff]
      %v173 = vld [vmem:[%s1 + $0x148] sm:$0xff]
      %v174 = vld [vmem:[%s1 + $0x150] sm:$0xff]
      %v175 = vld [vmem:[%s1 + $0x158] sm:$0xff]
      %v176 = vld [vmem:[%s1 + $0x160] sm:$0xff]
      %v177 = vld [vmem:[%s1 + $0x168] sm:$0xff]
      %v178 = vld [vmem:[%s1 + $0x170] sm:$0xff]
      %v179 = vld [vmem:[%s1 + $0x178] sm:$0xff]
      %v180 = vld [vmem:[%s1 + $0x180] sm:$0x1]
      %v181 = vld [vmem:[%s1 + $0x188] sm:$0x1]
      %v182 = vld [vmem:[%s1 + $0x190] sm:$0x1]
      %v183 = vld [vmem:[%s139] sm:$0xff]
      %v184 = vld [vmem:[%s139 + $0x8] sm:$0xff]
      %v185 = vld [vmem:[%s139 + $0x10] sm:$0xff]
      %v186 = vld [vmem:[%s139 + $0x18] sm:$0xff]
      %v187 = vld [vmem:[%s139 + $0x20] sm:$0xff]
      %v188 = vld [vmem:[%s139 + $0x28] sm:$0xff]
      %v189 = vld [vmem:[%s139 + $0x30] sm:$0xff]
      %v190 = vld [vmem:[%s139 + $0x38] sm:$0xff]
      %v191 = vld [vmem:[%s139 + $0x40] sm:$0xff]
      %v192 = vld [vmem:[%s139 + $0x48] sm:$0xff]
      %v193 = vld [vmem:[%s139 + $0x50] sm:$0xff]
      %v194 = vld [vmem:[%s139 + $0x58] sm:$0xff]
      %v195 = vld [vmem:[%s139 + $0x60] sm:$0xff]
      %v196 = vld [vmem:[%s139 + $0x68] sm:$0xff]
      %v197 = vld [vmem:[%s139 + $0x70] sm:$0xff]
      %v198 = vld [vmem:[%s139 + $0x78] sm:$0xff]
      %v199 = vld [vmem:[%s139 + $0x80] sm:$0xff]
      %v200 = vld [vmem:[%s139 + $0x88] sm:$0xff]
      %v201 = vld [vmem:[%s139 + $0x90] sm:$0xff]
      %v202 = vld [vmem:[%s139 + $0x98] sm:$0xff]
      %v203 = vld [vmem:[%s139 + $0xa0] sm:$0xff]
      %v204 = vld [vmem:[%s139 + $0xa8] sm:$0xff]
      %v205 = vld [vmem:[%s139 + $0xb0] sm:$0xff]
      %v206 = vld [vmem:[%s139 + $0xb8] sm:$0xff]
      %v207 = vld [vmem:[%s139 + $0xc0] sm:$0xff]
      %v208 = vld [vmem:[%s139 + $0xc8] sm:$0xff]
      %v209 = vld [vmem:[%s139 + $0xd0] sm:$0xff]
      %v210 = vld [vmem:[%s139 + $0xd8] sm:$0xff]
      %v211 = vld [vmem:[%s139 + $0xe0] sm:$0xff]
      %v212 = vld [vmem:[%s139 + $0xe8] sm:$0xff]
      %v213 = vld [vmem:[%s139 + $0xf0] sm:$0xff]
      %v214 = vld [vmem:[%s139 + $0xf8] sm:$0xff]
      %v215 = vlaneseq
      %v216 = vshrl.u32 %v215, 7
      %v217 = vsub.s32 0, %v216
      %v218 = vrot.slane %v180, %v217
      %vm219 = vcmask 31744
      %v221 = vsel %vm219, %v183, 0
      %v224 = vsel %vm219, %v184, 0
      %v227 = vsel %vm219, %v185, 0
      %v230 = vsel %vm219, %v186, 0
      %v233 = vsel %vm219, %v187, 0
      %v236 = vsel %vm219, %v188, 0
      %v239 = vsel %vm219, %v189, 0
      %v242 = vsel %vm219, %v190, 0
      %v245 = vsel %vm219, %v191, 0
      %v248 = vsel %vm219, %v192, 0
      %v251 = vsel %vm219, %v193, 0
      %v254 = vsel %vm219, %v194, 0
      %v257 = vsel %vm219, %v195, 0
      %v260 = vsel %vm219, %v196, 0
      %v263 = vsel %vm219, %v197, 0
      %v266 = vsel %vm219, %v198, 0
      %v269 = vsel %vm219, %v199, 0
      %v272 = vsel %vm219, %v200, 0
      %v275 = vsel %vm219, %v201, 0
      %v278 = vsel %vm219, %v202, 0
      %v281 = vsel %vm219, %v203, 0
      %v284 = vsel %vm219, %v204, 0
      %v287 = vsel %vm219, %v205, 0
      %v290 = vsel %vm219, %v206, 0
      %v293 = vsel %vm219, %v207, 0
      %v296 = vsel %vm219, %v208, 0
      %v299 = vsel %vm219, %v209, 0
      %v302 = vsel %vm219, %v210, 0
      %v305 = vsel %vm219, %v211, 0
      %v308 = vsel %vm219, %v212, 0
      %v311 = vsel %vm219, %v213, 0
      %v314 = vsel %vm219, %v214, 0
      %vm316 = vcmask 1043456
      %v318 = vsel %vm316, %v147, 0
      %320 = vmatprep.subr.mxu0 0.0
      %321 = vmatpush1.msra.mxu0 %v318
      %322 = vmatprep.subr.mxu0 0.0
      %323 = vmatpush1.msra.mxu0 0.0
      %324 = vmatprep.subr.mxu0 0.0
      %325 = vmatpush1.msra.mxu0 0.0
      %326 = vmatprep.subr.mxu0 0.0
      %327 = vmatpush1.msra.mxu0 0.0
      %328 = vmatprep.subr.mxu0 0.0
      %329 = vmatpush1.msra.mxu0 0.0
      %330 = vmatprep.subr.mxu0 0.0
      %331 = vmatpush1.msra.mxu0 0.0
      %332 = vmatprep.subr.mxu0 0.0
      %333 = vmatpush1.msra.mxu0 0.0
      %334 = vmatprep.subr.mxu0 0.0
      %335 = vmatpush1.msra.mxu0 0.0
      %336 = vmatprep.subr.mxu0 0.0
      %337 = vmatpush1.msra.mxu0 0.0
      %338 = vmatprep.subr.mxu0 0.0
      %339 = vmatpush1.msra.mxu0 0.0
      %340 = vmatprep.subr.mxu0 0.0
      %341 = vmatpush1.msra.mxu0 0.0
      %342 = vmatprep.subr.mxu0 0.0
      %343 = vmatpush1.msra.mxu0 0.0
      %344 = vmatprep.subr.mxu0 0.0
      %345 = vmatpush1.msra.mxu0 0.0
      %346 = vmatprep.subr.mxu0 0.0
      %347 = vmatpush1.msra.mxu0 0.0
      %348 = vmatprep.subr.mxu0 0.0
      %349 = vmatpush1.msra.mxu0 0.0
      %350 = vmatprep.subr.mxu0 0.0
      %351 = vmatpush1.msra.mxu0 0.0
      %352 = vmatprep.subr.mxu0 0.0
      %353 = vmatpush1.msra.mxu0 0.0
      %354 = vmatprep.subr.mxu0 0.0
      %355 = vmatpush1.msra.mxu0 0.0
      %356 = vmatprep.subr.mxu0 0.0
      %357 = vmatpush1.msra.mxu0 0.0
      %358 = vmatprep.subr.mxu0 0.0
      %359 = vmatpush1.msra.mxu0 0.0
      %360 = vmatprep.subr.mxu0 0.0
      %361 = vmatpush1.msra.mxu0 0.0
      %362 = vmatprep.subr.mxu0 0.0
      %363 = vmatpush1.msra.mxu0 0.0
      %364 = vmatprep.subr.mxu0 0.0
      %365 = vmatpush1.msra.mxu0 0.0
      %366 = vmatprep.subr.mxu0 0.0
      %367 = vmatpush1.msra.mxu0 0.0
      %368 = vmatprep.subr.mxu0 0.0
      %369 = vmatpush1.msra.mxu0 0.0
      %370 = vmatprep.subr.mxu0 0.0
      %371 = vmatpush1.msra.mxu0 0.0
      %372 = vmatprep.subr.mxu0 0.0
      %373 = vmatpush1.msra.mxu0 0.0
      %374 = vmatprep.subr.mxu0 0.0
      %375 = vmatpush1.msra.mxu0 0.0
      %376 = vmatprep.subr.mxu0 0.0
      %377 = vmatpush1.msra.mxu0 0.0
      %378 = vmatprep.subr.mxu0 0.0
      %379 = vmatpush1.msra.mxu0 0.0
      %380 = vmatprep.subr.mxu0 0.0
      %381 = vmatpush1.msra.mxu0 0.0
      %382 = vmatprep.subr.mxu0 0.0
      %383 = vmatpush1.msra.mxu0 0.0
      %384 = vmatprep.mubr.f32.mxu0 0.0
      %385 = vmatmul.mubr.f32.gmra.mrb[0].mxu0 %v221
      %v386 = vpop.f32.mrb[0].mxu0
      %v387 = vadd.f32 %v218, %v386
      %v388 = vpop.f32.mrb[0].mxu0
      %389 = vmatprep.mubr.f32.mxu0 0.0
      %390 = vmatmul.mubr.f32.gmra.mrb[0].mxu0 %v224
      %v391 = vpop.f32.mrb[0].mxu0
      %v392 = vadd.f32 %v218, %v391
      %v393 = vpop.f32.mrb[0].mxu0
      %394 = vmatprep.mubr.f32.mxu0 0.0
      %395 = vmatmul.mubr.f32.gmra.mrb[0].mxu0 %v227
      %v396 = vpop.f32.mrb[0].mxu0
      %v397 = vadd.f32 %v218, %v396
      %v398 = vpop.f32.mrb[0].mxu0
      %399 = vmatprep.mubr.f32.mxu0 0.0
      %400 = vmatmul.mubr.f32.gmra.mrb[0].mxu0 %v230
      %v401 = vpop.f32.mrb[0].mxu0
      %v402 = vadd.f32 %v218, %v401
      %v403 = vpop.f32.mrb[0].mxu0
      %404 = vmatprep.mubr.f32.mxu0 0.0
      %405 = vmatmul.mubr.f32.gmra.mrb[0].mxu0 %v233
      %v406 = vpop.f32.mrb[0].mxu0
      %v407 = vadd.f32 %v218, %v406
      %v408 = vpop.f32.mrb[0].mxu0
      %409 = vmatprep.mubr.f32.mxu0 0.0
      %410 = vmatmul.mubr.f32.gmra.mrb[0].mxu0 %v236
      %v411 = vpop.f32.mrb[0].mxu0
      %v412 = vadd.f32 %v218, %v411
      %v413 = vpop.f32.mrb[0].mxu0
      %414 = vmatprep.mubr.f32.mxu0 0.0
      %415 = vmatmul.mubr.f32.gmra.mrb[0].mxu0 %v239
      %v416 = vpop.f32.mrb[0].mxu0
      %v417 = vadd.f32 %v218, %v416
      %v418 = vpop.f32.mrb[0].mxu0
      %419 = vmatprep.mubr.f32.mxu0 0.0
      %420 = vmatmul.mubr.f32.gmra.mrb[0].mxu0 %v242
      %v421 = vpop.f32.mrb[0].mxu0
      %v422 = vadd.f32 %v218, %v421
      %v423 = vpop.f32.mrb[0].mxu0
      %424 = vmatprep.mubr.f32.mxu0 0.0
      %425 = vmatmul.mubr.f32.gmra.mrb[0].mxu0 %v245
      %v426 = vpop.f32.mrb[0].mxu0
      %v427 = vadd.f32 %v218, %v426
      %v428 = vpop.f32.mrb[0].mxu0
      %429 = vmatprep.mubr.f32.mxu0 0.0
      %430 = vmatmul.mubr.f32.gmra.mrb[0].mxu0 %v248
      %v431 = vpop.f32.mrb[0].mxu0
      %v432 = vadd.f32 %v218, %v431
      %v433 = vpop.f32.mrb[0].mxu0
      %434 = vmatprep.mubr.f32.mxu0 0.0
      %435 = vmatmul.mubr.f32.gmra.mrb[0].mxu0 %v251
      %v436 = vpop.f32.mrb[0].mxu0
      %v437 = vadd.f32 %v218, %v436
      %v438 = vpop.f32.mrb[0].mxu0
      %439 = vmatprep.mubr.f32.mxu0 0.0
      %440 = vmatmul.mubr.f32.gmra.mrb[0].mxu0 %v254
      %v441 = vpop.f32.mrb[0].mxu0
      %v442 = vadd.f32 %v218, %v441
      %v443 = vpop.f32.mrb[0].mxu0
      %444 = vmatprep.mubr.f32.mxu0 0.0
      %445 = vmatmul.mubr.f32.gmra.mrb[0].mxu0 %v257
      %v446 = vpop.f32.mrb[0].mxu0
      %v447 = vadd.f32 %v218, %v446
      %v448 = vpop.f32.mrb[0].mxu0
      %449 = vmatprep.mubr.f32.mxu0 0.0
      %450 = vmatmul.mubr.f32.gmra.mrb[0].mxu0 %v260
      %v451 = vpop.f32.mrb[0].mxu0
      %v452 = vadd.f32 %v218, %v451
      %v453 = vpop.f32.mrb[0].mxu0
      %454 = vmatprep.mubr.f32.mxu0 0.0
      %455 = vmatmul.mubr.f32.gmra.mrb[0].mxu0 %v263
      %v456 = vpop.f32.mrb[0].mxu0
      %v457 = vadd.f32 %v218, %v456
      %v458 = vpop.f32.mrb[0].mxu0
      %459 = vmatprep.mubr.f32.mxu0 0.0
      %460 = vmatmul.mubr.f32.gmra.mrb[0].mxu0 %v266
      %v461 = vpop.f32.mrb[0].mxu0
      %v462 = vadd.f32 %v218, %v461
      %v463 = vpop.f32.mrb[0].mxu0
      %464 = vmatprep.mubr.f32.mxu0 0.0
      %465 = vmatmul.mubr.f32.gmra.mrb[0].mxu0 %v269
      %v466 = vpop.f32.mrb[0].mxu0
      %v467 = vadd.f32 %v218, %v466
      %v468 = vpop.f32.mrb[0].mxu0
      %469 = vmatprep.mubr.f32.mxu0 0.0
      %470 = vmatmul.mubr.f32.gmra.mrb[0].mxu0 %v272
      %v471 = vpop.f32.mrb[0].mxu0
      %v472 = vadd.f32 %v218, %v471
      %v473 = vpop.f32.mrb[0].mxu0
      %474 = vmatprep.mubr.f32.mxu0 0.0
      %475 = vmatmul.mubr.f32.gmra.mrb[0].mxu0 %v275
      %v476 = vpop.f32.mrb[0].mxu0
      %v477 = vadd.f32 %v218, %v476
      %v478 = vpop.f32.mrb[0].mxu0
      %479 = vmatprep.mubr.f32.mxu0 0.0
      %480 = vmatmul.mubr.f32.gmra.mrb[0].mxu0 %v278
      %v481 = vpop.f32.mrb[0].mxu0
      %v482 = vadd.f32 %v218, %v481
      %v483 = vpop.f32.mrb[0].mxu0
      %484 = vmatprep.mubr.f32.mxu0 0.0
      %485 = vmatmul.mubr.f32.gmra.mrb[0].mxu0 %v281
      %v486 = vpop.f32.mrb[0].mxu0
      %v487 = vadd.f32 %v218, %v486
      %v488 = vpop.f32.mrb[0].mxu0
      %489 = vmatprep.mubr.f32.mxu0 0.0
      %490 = vmatmul.mubr.f32.gmra.mrb[0].mxu0 %v284
      %v491 = vpop.f32.mrb[0].mxu0
      %v492 = vadd.f32 %v218, %v491
      %v493 = vpop.f32.mrb[0].mxu0
      %494 = vmatprep.mubr.f32.mxu0 0.0
      %495 = vmatmul.mubr.f32.gmra.mrb[0].mxu0 %v287
      %v496 = vpop.f32.mrb[0].mxu0
      %v497 = vadd.f32 %v218, %v496
      %v498 = vpop.f32.mrb[0].mxu0
      %499 = vmatprep.mubr.f32.mxu0 0.0
      %500 = vmatmul.mubr.f32.gmra.mrb[0].mxu0 %v290
      %v501 = vpop.f32.mrb[0].mxu0
      %v502 = vadd.f32 %v218, %v501
      %v503 = vpop.f32.mrb[0].mxu0
      %504 = vmatprep.mubr.f32.mxu0 0.0
      %505 = vmatmul.mubr.f32.gmra.mrb[0].mxu0 %v293
      %v506 = vpop.f32.mrb[0].mxu0
      %v507 = vadd.f32 %v218, %v506
      %v508 = vpop.f32.mrb[0].mxu0
      %509 = vmatprep.mubr.f32.mxu0 0.0
      %510 = vmatmul.mubr.f32.gmra.mrb[0].mxu0 %v296
      %v511 = vpop.f32.mrb[0].mxu0
      %v512 = vadd.f32 %v218, %v511
      %v513 = vpop.f32.mrb[0].mxu0
      %514 = vmatprep.mubr.f32.mxu0 0.0
      %515 = vmatmul.mubr.f32.gmra.mrb[0].mxu0 %v299
      %v516 = vpop.f32.mrb[0].mxu0
      %v517 = vadd.f32 %v218, %v516
      %v518 = vpop.f32.mrb[0].mxu0
      %519 = vmatprep.mubr.f32.mxu0 0.0
      %520 = vmatmul.mubr.f32.gmra.mrb[0].mxu0 %v302
      %v521 = vpop.f32.mrb[0].mxu0
      %v522 = vadd.f32 %v218, %v521
      %v523 = vpop.f32.mrb[0].mxu0
      %524 = vmatprep.mubr.f32.mxu0 0.0
      %525 = vmatmul.mubr.f32.gmra.mrb[0].mxu0 %v305
      %v526 = vpop.f32.mrb[0].mxu0
      %v527 = vadd.f32 %v218, %v526
      %v528 = vpop.f32.mrb[0].mxu0
      %529 = vmatprep.mubr.f32.mxu0 0.0
      %530 = vmatmul.mubr.f32.gmra.mrb[0].mxu0 %v308
      %v531 = vpop.f32.mrb[0].mxu0
      %v532 = vadd.f32 %v218, %v531
      %v533 = vpop.f32.mrb[0].mxu0
      %534 = vmatprep.mubr.f32.mxu0 0.0
      %535 = vmatmul.mubr.f32.gmra.mrb[0].mxu0 %v311
      %v536 = vpop.f32.mrb[0].mxu0
      %v537 = vadd.f32 %v218, %v536
      %v538 = vpop.f32.mrb[0].mxu0
      %539 = vmatprep.mubr.f32.mxu0 0.0
      %540 = vmatmul.mubr.f32.gmra.mrb[0].mxu0 %v314
      %v541 = vpop.f32.mrb[0].mxu0
      %v542 = vadd.f32 %v218, %v541
      %v543 = vpop.f32.mrb[0].mxu0
      %544 = vdwg.mxu0
      %v545 = vmax.f32 %v387, 0.0
      %v546 = vmax.f32 %v392, 0.0
      %v547 = vmax.f32 %v397, 0.0
      %v548 = vmax.f32 %v402, 0.0
      %v549 = vmax.f32 %v407, 0.0
      %v550 = vmax.f32 %v412, 0.0
      %v551 = vmax.f32 %v417, 0.0
      %v552 = vmax.f32 %v422, 0.0
      %v553 = vmax.f32 %v427, 0.0
      %v554 = vmax.f32 %v432, 0.0
      %v555 = vmax.f32 %v437, 0.0
      %v556 = vmax.f32 %v442, 0.0
      %v557 = vmax.f32 %v447, 0.0
      %v558 = vmax.f32 %v452, 0.0
      %v559 = vmax.f32 %v457, 0.0
      %v560 = vmax.f32 %v462, 0.0
      %v561 = vmax.f32 %v467, 0.0
      %v562 = vmax.f32 %v472, 0.0
      %v563 = vmax.f32 %v477, 0.0
      %v564 = vmax.f32 %v482, 0.0
      %v565 = vmax.f32 %v487, 0.0
      %v566 = vmax.f32 %v492, 0.0
      %v567 = vmax.f32 %v497, 0.0
      %v568 = vmax.f32 %v502, 0.0
      %v569 = vmax.f32 %v507, 0.0
      %v570 = vmax.f32 %v512, 0.0
      %v571 = vmax.f32 %v517, 0.0
      %v572 = vmax.f32 %v522, 0.0
      %v573 = vmax.f32 %v527, 0.0
      %v574 = vmax.f32 %v532, 0.0
      %v575 = vmax.f32 %v537, 0.0
      %v576 = vmax.f32 %v542, 0.0
      %v577 = vlaneseq
      %v578 = vshrl.u32 %v577, 7
      %v579 = vsub.s32 0, %v578
      %v580 = vrot.slane %v181, %v579
      %581 = vmatprep.subr.mxu0 0.0
      %582 = vmatpush1.msra.mxu0 %v148
      %583 = vmatprep.subr.mxu0 0.0
      %584 = vmatpush1.msra.mxu0 %v149
      %585 = vmatprep.subr.mxu0 0.0
      %586 = vmatpush1.msra.mxu0 %v150
      %587 = vmatprep.subr.mxu0 0.0
      %588 = vmatpush1.msra.mxu0 %v151
      %589 = vmatprep.subr.mxu0 0.0
      %590 = vmatpush1.msra.mxu0 %v152
      %591 = vmatprep.subr.mxu0 0.0
      %592 = vmatpush1.msra.mxu0 %v153
      %593 = vmatprep.subr.mxu0 0.0
      %594 = vmatpush1.msra.mxu0 %v154
      %595 = vmatprep.subr.mxu0 0.0
      %596 = vmatpush1.msra.mxu0 %v155
      %597 = vmatprep.subr.mxu0 0.0
      %598 = vmatpush1.msra.mxu0 %v156
      %599 = vmatprep.subr.mxu0 0.0
      %600 = vmatpush1.msra.mxu0 %v157
      %601 = vmatprep.subr.mxu0 0.0
      %602 = vmatpush1.msra.mxu0 %v158
      %603 = vmatprep.subr.mxu0 0.0
      %604 = vmatpush1.msra.mxu0 %v159
      %605 = vmatprep.subr.mxu0 0.0
      %606 = vmatpush1.msra.mxu0 %v160
      %607 = vmatprep.subr.mxu0 0.0
      %608 = vmatpush1.msra.mxu0 %v161
      %609 = vmatprep.subr.mxu0 0.0
      %610 = vmatpush1.msra.mxu0 %v162
      %611 = vmatprep.subr.mxu0 0.0
      %612 = vmatpush1.msra.mxu0 %v163
      %613 = vmatprep.subr.mxu0 0.0
      %614 = vmatpush1.msra.mxu0 0.0
      %615 = vmatprep.subr.mxu0 0.0
      %616 = vmatpush1.msra.mxu0 0.0
      %617 = vmatprep.subr.mxu0 0.0
      %618 = vmatpush1.msra.mxu0 0.0
      %619 = vmatprep.subr.mxu0 0.0
      %620 = vmatpush1.msra.mxu0 0.0
      %621 = vmatprep.subr.mxu0 0.0
      %622 = vmatpush1.msra.mxu0 0.0
      %623 = vmatprep.subr.mxu0 0.0
      %624 = vmatpush1.msra.mxu0 0.0
      %625 = vmatprep.subr.mxu0 0.0
      %626 = vmatpush1.msra.mxu0 0.0
      %627 = vmatprep.subr.mxu0 0.0
      %628 = vmatpush1.msra.mxu0 0.0
      %629 = vmatprep.subr.mxu0 0.0
      %630 = vmatpush1.msra.mxu0 0.0
      %631 = vmatprep.subr.mxu0 0.0
      %632 = vmatpush1.msra.mxu0 0.0
      %633 = vmatprep.subr.mxu0 0.0
      %634 = vmatpush1.msra.mxu0 0.0
      %635 = vmatprep.subr.mxu0 0.0
      %636 = vmatpush1.msra.mxu0 0.0
      %637 = vmatprep.subr.mxu0 0.0
      %638 = vmatpush1.msra.mxu0 0.0
      %639 = vmatprep.subr.mxu0 0.0
      %640 = vmatpush1.msra.mxu0 0.0
      %641 = vmatprep.subr.mxu0 0.0
      %642 = vmatpush1.msra.mxu0 0.0
      %643 = vmatprep.subr.mxu0 0.0
      %644 = vmatpush1.msra.mxu0 0.0
      %645 = vmatprep.mubr.f32.mxu0 0.0
      %646 = vmatmul.mubr.f32.gmra.mrb[0].mxu0 %v545
      %v647 = vpop.f32.mrb[0].mxu0
      %v648 = vadd.f32 %v580, %v647
      %v649 = vpop.f32.mrb[0].mxu0
      %650 = vmatprep.mubr.f32.mxu0 0.0
      %651 = vmatmul.mubr.f32.gmra.mrb[0].mxu0 %v546
      %v652 = vpop.f32.mrb[0].mxu0
      %v653 = vadd.f32 %v580, %v652
      %v654 = vpop.f32.mrb[0].mxu0
      %655 = vmatprep.mubr.f32.mxu0 0.0
      %656 = vmatmul.mubr.f32.gmra.mrb[0].mxu0 %v547
      %v657 = vpop.f32.mrb[0].mxu0
      %v658 = vadd.f32 %v580, %v657
      %v659 = vpop.f32.mrb[0].mxu0
      %660 = vmatprep.mubr.f32.mxu0 0.0
      %661 = vmatmul.mubr.f32.gmra.mrb[0].mxu0 %v548
      %v662 = vpop.f32.mrb[0].mxu0
      %v663 = vadd.f32 %v580, %v662
      %v664 = vpop.f32.mrb[0].mxu0
      %665 = vmatprep.mubr.f32.mxu0 0.0
      %666 = vmatmul.mubr.f32.gmra.mrb[0].mxu0 %v549
      %v667 = vpop.f32.mrb[0].mxu0
      %v668 = vadd.f32 %v580, %v667
      %v669 = vpop.f32.mrb[0].mxu0
      %670 = vmatprep.mubr.f32.mxu0 0.0
      %671 = vmatmul.mubr.f32.gmra.mrb[0].mxu0 %v550
      %v672 = vpop.f32.mrb[0].mxu0
      %v673 = vadd.f32 %v580, %v672
      %v674 = vpop.f32.mrb[0].mxu0
      %675 = vmatprep.mubr.f32.mxu0 0.0
      %676 = vmatmul.mubr.f32.gmra.mrb[0].mxu0 %v551
      %v677 = vpop.f32.mrb[0].mxu0
      %v678 = vadd.f32 %v580, %v677
      %v679 = vpop.f32.mrb[0].mxu0
      %680 = vmatprep.mubr.f32.mxu0 0.0
      %681 = vmatmul.mubr.f32.gmra.mrb[0].mxu0 %v552
      %v682 = vpop.f32.mrb[0].mxu0
      %v683 = vadd.f32 %v580, %v682
      %v684 = vpop.f32.mrb[0].mxu0
      %685 = vmatprep.mubr.f32.mxu0 0.0
      %686 = vmatmul.mubr.f32.gmra.mrb[0].mxu0 %v553
      %v687 = vpop.f32.mrb[0].mxu0
      %v688 = vadd.f32 %v580, %v687
      %v689 = vpop.f32.mrb[0].mxu0
      %690 = vmatprep.mubr.f32.mxu0 0.0
      %691 = vmatmul.mubr.f32.gmra.mrb[0].mxu0 %v554
      %v692 = vpop.f32.mrb[0].mxu0
      %v693 = vadd.f32 %v580, %v692
      %v694 = vpop.f32.mrb[0].mxu0
      %695 = vmatprep.mubr.f32.mxu0 0.0
      %696 = vmatmul.mubr.f32.gmra.mrb[0].mxu0 %v555
      %v697 = vpop.f32.mrb[0].mxu0
      %v698 = vadd.f32 %v580, %v697
      %v699 = vpop.f32.mrb[0].mxu0
      %700 = vmatprep.mubr.f32.mxu0 0.0
      %701 = vmatmul.mubr.f32.gmra.mrb[0].mxu0 %v556
      %v702 = vpop.f32.mrb[0].mxu0
      %v703 = vadd.f32 %v580, %v702
      %v704 = vpop.f32.mrb[0].mxu0
      %705 = vmatprep.mubr.f32.mxu0 0.0
      %706 = vmatmul.mubr.f32.gmra.mrb[0].mxu0 %v557
      %v707 = vpop.f32.mrb[0].mxu0
      %v708 = vadd.f32 %v580, %v707
      %v709 = vpop.f32.mrb[0].mxu0
      %710 = vmatprep.mubr.f32.mxu0 0.0
      %711 = vmatmul.mubr.f32.gmra.mrb[0].mxu0 %v558
      %v712 = vpop.f32.mrb[0].mxu0
      %v713 = vadd.f32 %v580, %v712
      %v714 = vpop.f32.mrb[0].mxu0
      %715 = vmatprep.mubr.f32.mxu0 0.0
      %716 = vmatmul.mubr.f32.gmra.mrb[0].mxu0 %v559
      %v717 = vpop.f32.mrb[0].mxu0
      %v718 = vadd.f32 %v580, %v717
      %v719 = vpop.f32.mrb[0].mxu0
      %720 = vmatprep.mubr.f32.mxu0 0.0
      %721 = vmatmul.mubr.f32.gmra.mrb[0].mxu0 %v560
      %v722 = vpop.f32.mrb[0].mxu0
      %v723 = vadd.f32 %v580, %v722
      %v724 = vpop.f32.mrb[0].mxu0
      %725 = vmatprep.mubr.f32.mxu0 0.0
      %726 = vmatmul.mubr.f32.gmra.mrb[0].mxu0 %v561
      %v727 = vpop.f32.mrb[0].mxu0
      %v728 = vadd.f32 %v580, %v727
      %v729 = vpop.f32.mrb[0].mxu0
      %730 = vmatprep.mubr.f32.mxu0 0.0
      %731 = vmatmul.mubr.f32.gmra.mrb[0].mxu0 %v562
      %v732 = vpop.f32.mrb[0].mxu0
      %v733 = vadd.f32 %v580, %v732
      %v734 = vpop.f32.mrb[0].mxu0
      %735 = vmatprep.mubr.f32.mxu0 0.0
      %736 = vmatmul.mubr.f32.gmra.mrb[0].mxu0 %v563
      %v737 = vpop.f32.mrb[0].mxu0
      %v738 = vadd.f32 %v580, %v737
      %v739 = vpop.f32.mrb[0].mxu0
      %740 = vmatprep.mubr.f32.mxu0 0.0
      %741 = vmatmul.mubr.f32.gmra.mrb[0].mxu0 %v564
      %v742 = vpop.f32.mrb[0].mxu0
      %v743 = vadd.f32 %v580, %v742
      %v744 = vpop.f32.mrb[0].mxu0
      %745 = vmatprep.mubr.f32.mxu0 0.0
      %746 = vmatmul.mubr.f32.gmra.mrb[0].mxu0 %v565
      %v747 = vpop.f32.mrb[0].mxu0
      %v748 = vadd.f32 %v580, %v747
      %v749 = vpop.f32.mrb[0].mxu0
      %750 = vmatprep.mubr.f32.mxu0 0.0
      %751 = vmatmul.mubr.f32.gmra.mrb[0].mxu0 %v566
      %v752 = vpop.f32.mrb[0].mxu0
      %v753 = vadd.f32 %v580, %v752
      %v754 = vpop.f32.mrb[0].mxu0
      %755 = vmatprep.mubr.f32.mxu0 0.0
      %756 = vmatmul.mubr.f32.gmra.mrb[0].mxu0 %v567
      %v757 = vpop.f32.mrb[0].mxu0
      %v758 = vadd.f32 %v580, %v757
      %v759 = vpop.f32.mrb[0].mxu0
      %760 = vmatprep.mubr.f32.mxu0 0.0
      %761 = vmatmul.mubr.f32.gmra.mrb[0].mxu0 %v568
      %v762 = vpop.f32.mrb[0].mxu0
      %v763 = vadd.f32 %v580, %v762
      %v764 = vpop.f32.mrb[0].mxu0
      %765 = vmatprep.mubr.f32.mxu0 0.0
      %766 = vmatmul.mubr.f32.gmra.mrb[0].mxu0 %v569
      %v767 = vpop.f32.mrb[0].mxu0
      %v768 = vadd.f32 %v580, %v767
      %v769 = vpop.f32.mrb[0].mxu0
      %770 = vmatprep.mubr.f32.mxu0 0.0
      %771 = vmatmul.mubr.f32.gmra.mrb[0].mxu0 %v570
      %v772 = vpop.f32.mrb[0].mxu0
      %v773 = vadd.f32 %v580, %v772
      %v774 = vpop.f32.mrb[0].mxu0
      %775 = vmatprep.mubr.f32.mxu0 0.0
      %776 = vmatmul.mubr.f32.gmra.mrb[0].mxu0 %v571
      %v777 = vpop.f32.mrb[0].mxu0
      %v778 = vadd.f32 %v580, %v777
      %v779 = vpop.f32.mrb[0].mxu0
      %780 = vmatprep.mubr.f32.mxu0 0.0
      %781 = vmatmul.mubr.f32.gmra.mrb[0].mxu0 %v572
      %v782 = vpop.f32.mrb[0].mxu0
      %v783 = vadd.f32 %v580, %v782
      %v784 = vpop.f32.mrb[0].mxu0
      %785 = vmatprep.mubr.f32.mxu0 0.0
      %786 = vmatmul.mubr.f32.gmra.mrb[0].mxu0 %v573
      %v787 = vpop.f32.mrb[0].mxu0
      %v788 = vadd.f32 %v580, %v787
      %v789 = vpop.f32.mrb[0].mxu0
      %790 = vmatprep.mubr.f32.mxu0 0.0
      %791 = vmatmul.mubr.f32.gmra.mrb[0].mxu0 %v574
      %v792 = vpop.f32.mrb[0].mxu0
      %v793 = vadd.f32 %v580, %v792
      %v794 = vpop.f32.mrb[0].mxu0
      %795 = vmatprep.mubr.f32.mxu0 0.0
      %796 = vmatmul.mubr.f32.gmra.mrb[0].mxu0 %v575
      %v797 = vpop.f32.mrb[0].mxu0
      %v798 = vadd.f32 %v580, %v797
      %v799 = vpop.f32.mrb[0].mxu0
      %800 = vmatprep.mubr.f32.mxu0 0.0
      %801 = vmatmul.mubr.f32.gmra.mrb[0].mxu0 %v576
      %v802 = vpop.f32.mrb[0].mxu0
      %v803 = vadd.f32 %v580, %v802
      %v804 = vpop.f32.mrb[0].mxu0
      %805 = vdwg.mxu0
      %v806 = vmax.f32 %v648, 0.0
      %v807 = vmax.f32 %v653, 0.0
      %v808 = vmax.f32 %v658, 0.0
      %v809 = vmax.f32 %v663, 0.0
      %v810 = vmax.f32 %v668, 0.0
      %v811 = vmax.f32 %v673, 0.0
      %v812 = vmax.f32 %v678, 0.0
      %v813 = vmax.f32 %v683, 0.0
      %v814 = vmax.f32 %v688, 0.0
      %v815 = vmax.f32 %v693, 0.0
      %v816 = vmax.f32 %v698, 0.0
      %v817 = vmax.f32 %v703, 0.0
      %v818 = vmax.f32 %v708, 0.0
      %v819 = vmax.f32 %v713, 0.0
      %v820 = vmax.f32 %v718, 0.0
      %v821 = vmax.f32 %v723, 0.0
      %v822 = vmax.f32 %v728, 0.0
      %v823 = vmax.f32 %v733, 0.0
      %v824 = vmax.f32 %v738, 0.0
      %v825 = vmax.f32 %v743, 0.0
      %v826 = vmax.f32 %v748, 0.0
      %v827 = vmax.f32 %v753, 0.0
      %v828 = vmax.f32 %v758, 0.0
      %v829 = vmax.f32 %v763, 0.0
      %v830 = vmax.f32 %v768, 0.0
      %v831 = vmax.f32 %v773, 0.0
      %v832 = vmax.f32 %v778, 0.0
      %v833 = vmax.f32 %v783, 0.0
      %v834 = vmax.f32 %v788, 0.0
      %v835 = vmax.f32 %v793, 0.0
      %v836 = vmax.f32 %v798, 0.0
      %v837 = vmax.f32 %v803, 0.0
      %v838 = vlaneseq
      %v839 = vshrl.u32 %v838, 7
      %v840 = vsub.s32 0, %v839
      %v841 = vrot.slane %v182, %v840
      %842 = vmatprep.subr.mxu0 0.0
      %843 = vmatpush1.msra.mxu0 %v164
      %844 = vmatprep.subr.mxu0 0.0
      %845 = vmatpush1.msra.mxu0 %v165
      %846 = vmatprep.subr.mxu0 0.0
      %847 = vmatpush1.msra.mxu0 %v166
      %848 = vmatprep.subr.mxu0 0.0
      %849 = vmatpush1.msra.mxu0 %v167
      %850 = vmatprep.subr.mxu0 0.0
      %851 = vmatpush1.msra.mxu0 %v168
      %852 = vmatprep.subr.mxu0 0.0
      %853 = vmatpush1.msra.mxu0 %v169
      %854 = vmatprep.subr.mxu0 0.0
      %855 = vmatpush1.msra.mxu0 %v170
      %856 = vmatprep.subr.mxu0 0.0
      %857 = vmatpush1.msra.mxu0 %v171
      %858 = vmatprep.subr.mxu0 0.0
      %859 = vmatpush1.msra.mxu0 %v172
      %860 = vmatprep.subr.mxu0 0.0
      %861 = vmatpush1.msra.mxu0 %v173
      %862 = vmatprep.subr.mxu0 0.0
      %863 = vmatpush1.msra.mxu0 %v174
      %864 = vmatprep.subr.mxu0 0.0
      %865 = vmatpush1.msra.mxu0 %v175
      %866 = vmatprep.subr.mxu0 0.0
      %867 = vmatpush1.msra.mxu0 %v176
      %868 = vmatprep.subr.mxu0 0.0
      %869 = vmatpush1.msra.mxu0 %v177
      %870 = vmatprep.subr.mxu0 0.0
      %871 = vmatpush1.msra.mxu0 %v178
      %872 = vmatprep.subr.mxu0 0.0
      %873 = vmatpush1.msra.mxu0 %v179
      %874 = vmatprep.subr.mxu0 0.0
      %875 = vmatpush1.msra.mxu0 0.0
      %876 = vmatprep.subr.mxu0 0.0
      %877 = vmatpush1.msra.mxu0 0.0
      %878 = vmatprep.subr.mxu0 0.0
      %879 = vmatpush1.msra.mxu0 0.0
      %880 = vmatprep.subr.mxu0 0.0
      %881 = vmatpush1.msra.mxu0 0.0
      %882 = vmatprep.subr.mxu0 0.0
      %883 = vmatpush1.msra.mxu0 0.0
      %884 = vmatprep.subr.mxu0 0.0
      %885 = vmatpush1.msra.mxu0 0.0
      %886 = vmatprep.subr.mxu0 0.0
      %887 = vmatpush1.msra.mxu0 0.0
      %888 = vmatprep.subr.mxu0 0.0
      %889 = vmatpush1.msra.mxu0 0.0
      %890 = vmatprep.subr.mxu0 0.0
      %891 = vmatpush1.msra.mxu0 0.0
      %892 = vmatprep.subr.mxu0 0.0
      %893 = vmatpush1.msra.mxu0 0.0
      %894 = vmatprep.subr.mxu0 0.0
      %895 = vmatpush1.msra.mxu0 0.0
      %896 = vmatprep.subr.mxu0 0.0
      %897 = vmatpush1.msra.mxu0 0.0
      %898 = vmatprep.subr.mxu0 0.0
      %899 = vmatpush1.msra.mxu0 0.0
      %900 = vmatprep.subr.mxu0 0.0
      %901 = vmatpush1.msra.mxu0 0.0
      %902 = vmatprep.subr.mxu0 0.0
      %903 = vmatpush1.msra.mxu0 0.0
      %904 = vmatprep.subr.mxu0 0.0
      %905 = vmatpush1.msra.mxu0 0.0
      %906 = vmatprep.mubr.f32.mxu0 0.0
      %907 = vmatmul.mubr.f32.gmra.mrb[0].mxu0 %v806
      %v908 = vpop.f32.mrb[0].mxu0
      %v909 = vadd.f32 %v841, %v908
      %v910 = vpop.f32.mrb[0].mxu0
      %911 = vmatprep.mubr.f32.mxu0 0.0
      %912 = vmatmul.mubr.f32.gmra.mrb[0].mxu0 %v807
      %v913 = vpop.f32.mrb[0].mxu0
      %v914 = vadd.f32 %v841, %v913
      %v915 = vpop.f32.mrb[0].mxu0
      %916 = vmatprep.mubr.f32.mxu0 0.0
      %917 = vmatmul.mubr.f32.gmra.mrb[0].mxu0 %v808
      %v918 = vpop.f32.mrb[0].mxu0
      %v919 = vadd.f32 %v841, %v918
      %v920 = vpop.f32.mrb[0].mxu0
      %921 = vmatprep.mubr.f32.mxu0 0.0
      %922 = vmatmul.mubr.f32.gmra.mrb[0].mxu0 %v809
      %v923 = vpop.f32.mrb[0].mxu0
      %v924 = vadd.f32 %v841, %v923
      %v925 = vpop.f32.mrb[0].mxu0
      %926 = vmatprep.mubr.f32.mxu0 0.0
      %927 = vmatmul.mubr.f32.gmra.mrb[0].mxu0 %v810
      %v928 = vpop.f32.mrb[0].mxu0
      %v929 = vadd.f32 %v841, %v928
      %v930 = vpop.f32.mrb[0].mxu0
      %931 = vmatprep.mubr.f32.mxu0 0.0
      %932 = vmatmul.mubr.f32.gmra.mrb[0].mxu0 %v811
      %v933 = vpop.f32.mrb[0].mxu0
      %v934 = vadd.f32 %v841, %v933
      %v935 = vpop.f32.mrb[0].mxu0
      %936 = vmatprep.mubr.f32.mxu0 0.0
      %937 = vmatmul.mubr.f32.gmra.mrb[0].mxu0 %v812
      %v938 = vpop.f32.mrb[0].mxu0
      %v939 = vadd.f32 %v841, %v938
      %v940 = vpop.f32.mrb[0].mxu0
      %941 = vmatprep.mubr.f32.mxu0 0.0
      %942 = vmatmul.mubr.f32.gmra.mrb[0].mxu0 %v813
      %v943 = vpop.f32.mrb[0].mxu0
      %v944 = vadd.f32 %v841, %v943
      %v945 = vpop.f32.mrb[0].mxu0
      %946 = vmatprep.mubr.f32.mxu0 0.0
      %947 = vmatmul.mubr.f32.gmra.mrb[0].mxu0 %v814
      %v948 = vpop.f32.mrb[0].mxu0
      %v949 = vadd.f32 %v841, %v948
      %v950 = vpop.f32.mrb[0].mxu0
      %951 = vmatprep.mubr.f32.mxu0 0.0
      %952 = vmatmul.mubr.f32.gmra.mrb[0].mxu0 %v815
      %v953 = vpop.f32.mrb[0].mxu0
      %v954 = vadd.f32 %v841, %v953
      %v955 = vpop.f32.mrb[0].mxu0
      %956 = vmatprep.mubr.f32.mxu0 0.0
      %957 = vmatmul.mubr.f32.gmra.mrb[0].mxu0 %v816
      %v958 = vpop.f32.mrb[0].mxu0
      %v959 = vadd.f32 %v841, %v958
      %v960 = vpop.f32.mrb[0].mxu0
      %961 = vmatprep.mubr.f32.mxu0 0.0
      %962 = vmatmul.mubr.f32.gmra.mrb[0].mxu0 %v817
      %v963 = vpop.f32.mrb[0].mxu0
      %v964 = vadd.f32 %v841, %v963
      %v965 = vpop.f32.mrb[0].mxu0
      %966 = vmatprep.mubr.f32.mxu0 0.0
      %967 = vmatmul.mubr.f32.gmra.mrb[0].mxu0 %v818
      %v968 = vpop.f32.mrb[0].mxu0
      %v969 = vadd.f32 %v841, %v968
      %v970 = vpop.f32.mrb[0].mxu0
      %971 = vmatprep.mubr.f32.mxu0 0.0
      %972 = vmatmul.mubr.f32.gmra.mrb[0].mxu0 %v819
      %v973 = vpop.f32.mrb[0].mxu0
      %v974 = vadd.f32 %v841, %v973
      %v975 = vpop.f32.mrb[0].mxu0
      %976 = vmatprep.mubr.f32.mxu0 0.0
      %977 = vmatmul.mubr.f32.gmra.mrb[0].mxu0 %v820
      %v978 = vpop.f32.mrb[0].mxu0
      %v979 = vadd.f32 %v841, %v978
      %v980 = vpop.f32.mrb[0].mxu0
      %981 = vmatprep.mubr.f32.mxu0 0.0
      %982 = vmatmul.mubr.f32.gmra.mrb[0].mxu0 %v821
      %v983 = vpop.f32.mrb[0].mxu0
      %v984 = vadd.f32 %v841, %v983
      %v985 = vpop.f32.mrb[0].mxu0
      %986 = vmatprep.mubr.f32.mxu0 0.0
      %987 = vmatmul.mubr.f32.gmra.mrb[0].mxu0 %v822
      %v988 = vpop.f32.mrb[0].mxu0
      %v989 = vadd.f32 %v841, %v988
      %v990 = vpop.f32.mrb[0].mxu0
      %991 = vmatprep.mubr.f32.mxu0 0.0
      %992 = vmatmul.mubr.f32.gmra.mrb[0].mxu0 %v823
      %v993 = vpop.f32.mrb[0].mxu0
      %v994 = vadd.f32 %v841, %v993
      %v995 = vpop.f32.mrb[0].mxu0
      %996 = vmatprep.mubr.f32.mxu0 0.0
      %997 = vmatmul.mubr.f32.gmra.mrb[0].mxu0 %v824
      %v998 = vpop.f32.mrb[0].mxu0
      %v999 = vadd.f32 %v841, %v998
      %v1000 = vpop.f32.mrb[0].mxu0
      %1001 = vmatprep.mubr.f32.mxu0 0.0
      %1002 = vmatmul.mubr.f32.gmra.mrb[0].mxu0 %v825
      %v1003 = vpop.f32.mrb[0].mxu0
      %v1004 = vadd.f32 %v841, %v1003
      %v1005 = vpop.f32.mrb[0].mxu0
      %1006 = vmatprep.mubr.f32.mxu0 0.0
      %1007 = vmatmul.mubr.f32.gmra.mrb[0].mxu0 %v826
      %v1008 = vpop.f32.mrb[0].mxu0
      %v1009 = vadd.f32 %v841, %v1008
      %v1010 = vpop.f32.mrb[0].mxu0
      %1011 = vmatprep.mubr.f32.mxu0 0.0
      %1012 = vmatmul.mubr.f32.gmra.mrb[0].mxu0 %v827
      %v1013 = vpop.f32.mrb[0].mxu0
      %v1014 = vadd.f32 %v841, %v1013
      %v1015 = vpop.f32.mrb[0].mxu0
      %1016 = vmatprep.mubr.f32.mxu0 0.0
      %1017 = vmatmul.mubr.f32.gmra.mrb[0].mxu0 %v828
      %v1018 = vpop.f32.mrb[0].mxu0
      %v1019 = vadd.f32 %v841, %v1018
      %v1020 = vpop.f32.mrb[0].mxu0
      %1021 = vmatprep.mubr.f32.mxu0 0.0
      %1022 = vmatmul.mubr.f32.gmra.mrb[0].mxu0 %v829
      %v1023 = vpop.f32.mrb[0].mxu0
      %v1024 = vadd.f32 %v841, %v1023
      %v1025 = vpop.f32.mrb[0].mxu0
      %1026 = vmatprep.mubr.f32.mxu0 0.0
      %1027 = vmatmul.mubr.f32.gmra.mrb[0].mxu0 %v830
      %v1028 = vpop.f32.mrb[0].mxu0
      %v1029 = vadd.f32 %v841, %v1028
      %v1030 = vpop.f32.mrb[0].mxu0
      %1031 = vmatprep.mubr.f32.mxu0 0.0
      %1032 = vmatmul.mubr.f32.gmra.mrb[0].mxu0 %v831
      %v1033 = vpop.f32.mrb[0].mxu0
      %v1034 = vadd.f32 %v841, %v1033
      %v1035 = vpop.f32.mrb[0].mxu0
      %1036 = vmatprep.mubr.f32.mxu0 0.0
      %1037 = vmatmul.mubr.f32.gmra.mrb[0].mxu0 %v832
      %v1038 = vpop.f32.mrb[0].mxu0
      %v1039 = vadd.f32 %v841, %v1038
      %v1040 = vpop.f32.mrb[0].mxu0
      %1041 = vmatprep.mubr.f32.mxu0 0.0
      %1042 = vmatmul.mubr.f32.gmra.mrb[0].mxu0 %v833
      %v1043 = vpop.f32.mrb[0].mxu0
      %v1044 = vadd.f32 %v841, %v1043
      %v1045 = vpop.f32.mrb[0].mxu0
      %1046 = vmatprep.mubr.f32.mxu0 0.0
      %1047 = vmatmul.mubr.f32.gmra.mrb[0].mxu0 %v834
      %v1048 = vpop.f32.mrb[0].mxu0
      %v1049 = vadd.f32 %v841, %v1048
      %v1050 = vpop.f32.mrb[0].mxu0
      %1051 = vmatprep.mubr.f32.mxu0 0.0
      %1052 = vmatmul.mubr.f32.gmra.mrb[0].mxu0 %v835
      %v1053 = vpop.f32.mrb[0].mxu0
      %v1054 = vadd.f32 %v841, %v1053
      %v1055 = vpop.f32.mrb[0].mxu0
      %1056 = vmatprep.mubr.f32.mxu0 0.0
      %1057 = vmatmul.mubr.f32.gmra.mrb[0].mxu0 %v836
      %v1058 = vpop.f32.mrb[0].mxu0
      %v1059 = vadd.f32 %v841, %v1058
      %v1060 = vpop.f32.mrb[0].mxu0
      %1061 = vmatprep.mubr.f32.mxu0 0.0
      %1062 = vmatmul.mubr.f32.gmra.mrb[0].mxu0 %v837
      %v1063 = vpop.f32.mrb[0].mxu0
      %v1064 = vadd.f32 %v841, %v1063
      %v1065 = vpop.f32.mrb[0].mxu0
      %1066 = vdwg.mxu0
      %vm1067 = vcmask 15360
      %1068 = vst.msk [vmem:[%s145] sm:$0xff] %vm1067, %v909
      %1069 = vst.msk [vmem:[%s145 + $0x8] sm:$0xff] %vm1067, %v914
      %1070 = vst.msk [vmem:[%s145 + $0x10] sm:$0xff] %vm1067, %v919
      %1071 = vst.msk [vmem:[%s145 + $0x18] sm:$0xff] %vm1067, %v924
      %1072 = vst.msk [vmem:[%s145 + $0x20] sm:$0xff] %vm1067, %v929
      %1073 = vst.msk [vmem:[%s145 + $0x28] sm:$0xff] %vm1067, %v934
      %1074 = vst.msk [vmem:[%s145 + $0x30] sm:$0xff] %vm1067, %v939
      %1075 = vst.msk [vmem:[%s145 + $0x38] sm:$0xff] %vm1067, %v944
      %1076 = vst.msk [vmem:[%s145 + $0x40] sm:$0xff] %vm1067, %v949
      %1077 = vst.msk [vmem:[%s145 + $0x48] sm:$0xff] %vm1067, %v954
      %1078 = vst.msk [vmem:[%s145 + $0x50] sm:$0xff] %vm1067, %v959
      %1079 = vst.msk [vmem:[%s145 + $0x58] sm:$0xff] %vm1067, %v964
      %1080 = vst.msk [vmem:[%s145 + $0x60] sm:$0xff] %vm1067, %v969
      %1081 = vst.msk [vmem:[%s145 + $0x68] sm:$0xff] %vm1067, %v974
      %1082 = vst.msk [vmem:[%s145 + $0x70] sm:$0xff] %vm1067, %v979
      %1083 = vst.msk [vmem:[%s145 + $0x78] sm:$0xff] %vm1067, %v984
      %1084 = vst.msk [vmem:[%s145 + $0x80] sm:$0xff] %vm1067, %v989
      %1085 = vst.msk [vmem:[%s145 + $0x88] sm:$0xff] %vm1067, %v994
      %1086 = vst.msk [vmem:[%s145 + $0x90] sm:$0xff] %vm1067, %v999
      %1087 = vst.msk [vmem:[%s145 + $0x98] sm:$0xff] %vm1067, %v1004
      %1088 = vst.msk [vmem:[%s145 + $0xa0] sm:$0xff] %vm1067, %v1009
      %1089 = vst.msk [vmem:[%s145 + $0xa8] sm:$0xff] %vm1067, %v1014
      %1090 = vst.msk [vmem:[%s145 + $0xb0] sm:$0xff] %vm1067, %v1019
      %1091 = vst.msk [vmem:[%s145 + $0xb8] sm:$0xff] %vm1067, %v1024
      %1092 = vst.msk [vmem:[%s145 + $0xc0] sm:$0xff] %vm1067, %v1029
      %1093 = vst.msk [vmem:[%s145 + $0xc8] sm:$0xff] %vm1067, %v1034
      %1094 = vst.msk [vmem:[%s145 + $0xd0] sm:$0xff] %vm1067, %v1039
      %1095 = vst.msk [vmem:[%s145 + $0xd8] sm:$0xff] %vm1067, %v1044
      %1096 = vst.msk [vmem:[%s145 + $0xe0] sm:$0xff] %vm1067, %v1049
      %1097 = vst.msk [vmem:[%s145 + $0xe8] sm:$0xff] %vm1067, %v1054
      %1098 = vst.msk [vmem:[%s145 + $0xf0] sm:$0xff] %vm1067, %v1059
      %1099 = vst.msk [vmem:[%s145 + $0xf8] sm:$0xff] %vm1067, %v1064
      %s1100 = smul.u32 32, %s13
      %p1101 = scmp.lt.s32.totalorder %s1100, 63
      %s1102 = scalar_select %p1101, %s1100, 63
      %s1103 = smul.addr %s1102, 8
      %s1104 = scalar_lea.vmem %s2, %s1103
      // Predicated region
      $region29: #{qnetwork_forward.1} parent=27 // pred_check
        %p1105 = pneg %p78
      $region30: #{qnetwork_forward.1} parent=27 // pred_check_branch
        %1107 = sbr.rel (%p1105) target = $region32
      $region31: #{qnetwork_forward.1} parent=27 // pred_region
        %s1108 = smul.u32 32, %s13
      $region32: #{qnetwork_forward.1} parent=27 // pred_fallthru
        _
    $region28: #{qnetwork_forward.1} parent=5 // pred_fallthru
      _
    %p1109 = scmp.le.s32.totalorder 2, %s8
    // Predicated region
    $region33: #{qnetwork_forward.1} parent=5 // pred_check
      %p1110 = pneg %p1109
    $region34: #{qnetwork_forward.1} parent=5 // pred_check_branch
      %1112 = sbr.rel (%p1110) target = $region36
    $region35: #{qnetwork_forward.1} parent=5 // pred_region
      %s1113 = ssub.s32 %s8, 2
      // Predicated region
      $region37: #{qnetwork_forward.1} parent=35 // pred_check
        %p1114 = pneg %p84
      $region38: #{qnetwork_forward.1} parent=35 // pred_check_branch
        %1116 = sbr.rel (%p1114) target = $region40
      $region39: #{qnetwork_forward.1} parent=35 // pred_region
        %s1117 = smul.u32 32, %s14
        %p1118 = scmp.lt.s32.totalorder %s1117, 63
        %s1119 = scalar_select %p1118, %s1117, 63
        %s1120 = smul.addr %s1119, 8
        %s1121 = scalar_lea.vmem %s2, %s1120
      $region40: #{qnetwork_forward.1} parent=35 // pred_fallthru
        _
    $region36: #{qnetwork_forward.1} parent=5 // pred_fallthru
      _
  $region6: #{qnetwork_forward.1} parent=0 // loop_footer
    %s12 = sadd.s32 1, %s8
  $region7: #{qnetwork_forward.1} parent=0 // loop_footer_branch
    %7 = sbr.rel target = $region3
  $region8: #{qnetwork_forward.1} parent=0 // loop_exit
    _

</llo_original>
